<compile_context>
chip_gen: v7x
topology: tpu7x:2x2x1
jax: 0.10.0
libtpu: 0.0.40
codegen_flags: <defaults>
</compile_context>

<pallas_src>
import functools

import jax
import jax.numpy as jnp
from jax.experimental import pallas as pl
from jax.experimental.pallas import tpu as pltpu


def _copy_kernel(x_ref, o_ref):
    # Fast path: column subsampling already happened at the DMA level
    # (BlockSpec only selects the first C lanes of each stride*C group), so
    # the body is a dense, layout-identical VMEM copy.
    o_ref[...] = x_ref[...]


def _row_subsample_kernel(x_ref, o_ref, *, stride, out_res, resolution):
    # x_ref: (tb, 1, resolution, C) -- one kept spatial row per grid step
    #        (discarded rows were never read from HBM: index_map uses i*stride)
    # o_ref: (tb, 1, out_res,   C) -- that row with every stride-th column kept
    if out_res * stride <= resolution:
        # Strided sublane read straight from the ref (proven lowering).
        o_ref[...] = x_ref[:, :, pl.ds(0, out_res, stride=stride), :]
    else:
        # Odd resolution (e.g. res=7, stride=2): read only the touched span,
        # then strided-slice the value so bounds are trivially respected.
        span = (out_res - 1) * stride + 1
        rows = x_ref[:, :, pl.ds(0, span), :]
        o_ref[...] = rows[:, :, ::stride, :]


def _round_up(v, m):
    return -(-v // m) * m


def subsample(x, stride, resolution):
    """Pallas equivalent of Levit's Subsample.forward."""
    B, N, C = x.shape
    assert N == resolution * resolution, "N must equal resolution**2"
    out_res = -(-resolution // stride)  # ceil, matches python ::stride slicing
    out_n = out_res * out_res

    if stride == 1:
        return x  # identity

    dtype = x.dtype
    itemsize = jnp.dtype(dtype).itemsize
    sublane = {4: 8, 2: 16, 1: 32}.get(itemsize, 8)   # sublane quantum per dtype
    lane_c = _round_up(C, 128)                        # lane-padded channel dim

    # Generation-aware VMEM budgeting (v5e/v6e: 128 MiB, v7x: 64 MiB per TC).
    try:
        vmem_cap = int(pltpu.get_tpu_info().vmem_capacity_bytes)
    except Exception:
        vmem_cap = 64 * 1024 * 1024  # conservative (v7x-sized) fallback
    budget = vmem_cap // 4                                   # live-block budget
    vmem_limit = min((3 * vmem_cap) // 4, 96 * 1024 * 1024)  # 48 MiB on v7x, 96 MiB on v5e/v6e

    # Fast path gate: column skip at the DMA level needs an exact
    # (out_res, stride, C) factorization of each row, lane-aligned blocks, and
    # DMA bursts of at least ~512 B so strided reads stay efficient.
    use_col_skip = (
        resolution % stride == 0 and C % 128 == 0 and C * itemsize >= 512
    )

    # Per-batch VMEM footprint using PADDED tile sizes (sublane/lane round-up),
    # x2 for double buffering of each BlockSpec.
    if use_col_skip:
        in_rows_padded = _round_up(out_res, sublane)
        per_batch_read = out_res * C * itemsize           # actual HBM bytes read / row
    else:
        in_rows_padded = _round_up(resolution, sublane)
        per_batch_read = resolution * C * itemsize
    out_rows_padded = _round_up(out_res, sublane)
    per_batch_vmem = 2 * (in_rows_padded + out_rows_padded) * lane_c * itemsize

    tb = max(1, min(B, budget // max(per_batch_vmem, 1)))
    # v7x megacore: keep >=2 batch-axis steps when that still leaves >=512 KiB
    # per-step DMAs (on v5e/v6e this is harmless).
    if B >= 2 and tb >= B:
        half = -(-B // 2)
        if half * per_batch_read >= 512 * 1024:
            tb = half
    nb = pl.cdiv(B, tb)  # ragged batch edge handled by Pallas, no tb shrinkage

    if use_col_skip:
        # (B, res, out_res, stride*C): free reshape. Blocking only the first C
        # lanes of the last axis means discarded columns are never DMA'd.
        xv = x.reshape(B, resolution, out_res, stride * C)
        in_spec = pl.BlockSpec(
            (tb, 1, out_res, C), lambda b, i: (b, i * stride, 0, 0)
        )
        kernel = _copy_kernel
        read_bytes = B * out_n * C * itemsize
    else:
        # (B, res, res, C): rows skipped at DMA level, columns in VMEM.
        # TODO(synk): for small / non-128-multiple C this path keeps C as the
        # lane dim (burst = C*itemsize); a lane-dense (out_res*C) repack would
        # need an in-VMEM relayout and is not worth it for LeViT's C >= 192.
        xv = x.reshape(B, resolution, resolution, C)
        in_spec = pl.BlockSpec(
            (tb, 1, resolution, C), lambda b, i: (b, i * stride, 0, 0)
        )
        kernel = functools.partial(
            _row_subsample_kernel,
            stride=stride,
            out_res=out_res,
            resolution=resolution,
        )
        read_bytes = B * out_res * resolution * C * itemsize
    write_bytes = B * out_n * C * itemsize

    out4 = pl.pallas_call(
        kernel,
        out_shape=jax.ShapeDtypeStruct((B, out_res, out_res, C), dtype),
        grid_spec=pltpu.PrefetchScalarGridSpec(
            num_scalar_prefetch=0,
            grid=(nb, out_res),
            in_specs=[in_spec],
            out_specs=pl.BlockSpec(
                (tb, 1, out_res, C), lambda b, i: (b, i, 0, 0)
            ),
        ),
        compiler_params=pltpu.CompilerParams(
            dimension_semantics=("parallel", "parallel"),
            vmem_limit_bytes=vmem_limit,
        ),
        cost_estimate=pl.CostEstimate(
            flops=0,
            transcendentals=0,
            bytes_accessed=read_bytes + write_bytes,
        ),
    )(xv)

    return out4.reshape(B, out_n, C)


def subsample_ref(x, stride, resolution):
    B, N, C = x.shape
    x = x.reshape(B, resolution, resolution, C)[:, ::stride, ::stride]
    return x.reshape(B, -1, C)


if __name__ == "__main__":
    key = jax.random.PRNGKey(0)
    k1, k2 = jax.random.split(key)

    # Config 1: module-default small shapes (B=2, resolution=16, C=4, stride=2)
    # -> exercises the fallback path (small C).
    B, resolution, C, stride = 2, 16, 4, 2
    x1 = jax.random.normal(k1, (B, resolution * resolution, C), dtype=jnp.float32)
    out1 = jax.block_until_ready(subsample(x1, stride, resolution))
    exp1 = subsample_ref(x1, stride, resolution)
    assert out1.shape == exp1.shape, (out1.shape, exp1.shape)
    assert jnp.allclose(out1, exp1), "mismatch vs reference (fallback path)"

    # Config 2: lane-aligned channels (C=128) -> exercises the column-skip-at-DMA
    # fast path (reads exactly the output bytes from HBM).
    B2, res2, C2, s2 = 2, 8, 128, 2
    x2 = jax.random.normal(k2, (B2, res2 * res2, C2), dtype=jnp.float32)
    out2 = jax.block_until_ready(subsample(x2, s2, res2))
    exp2 = subsample_ref(x2, s2, res2)
    assert out2.shape == exp2.shape, (out2.shape, exp2.shape)
    assert jnp.allclose(out2, exp2), "mismatch vs reference (fast path)"

    print("KERNEL_OK")
</pallas_src>

<mosaic_0001>
module attributes {stable_mosaic.version = 11 : i64} {
  func.func @_row_subsample_kernel(%arg0: i32, %arg1: i32, %arg2: memref<2x1x16x4xf32, #tpu.memory_space<vmem>>, %arg3: memref<2x1x8x4xf32, #tpu.memory_space<vmem>>) attributes {dimension_semantics = [#tpu.dimension_semantics<parallel>, #tpu.dimension_semantics<parallel>], iteration_bounds = array<i64: 1, 8>, scalar_prefetch = 0 : i64, scratch_operands = 0 : i64, tpu.core_type = #tpu.core_type<tc>, window_params = [{transform_indices = @transform_0, window_bounds = array<i64: 2, 1, 16, 4>}, {transform_indices = @transform_1, window_bounds = array<i64: 2, 1, 8, 4>}]} {
    %c0 = arith.constant 0 : index
    %c0_0 = arith.constant 0 : index
    %c0_1 = arith.constant 0 : index
    %c0_2 = arith.constant 0 : index
    %0 = tpu.strided_load %arg2[%c0, %c0_0, %c0_1, %c0_2] {strides = array<i32: 1, 1, 2, 1>} : memref<2x1x16x4xf32, #tpu.memory_space<vmem>>, vector<2x1x8x4xf32>
    %c0_3 = arith.constant 0 : index
    %c0_4 = arith.constant 0 : index
    %c0_5 = arith.constant 0 : index
    %c0_6 = arith.constant 0 : index
    %1 = vector.load %arg3[%c0_3, %c0_4, %c0_5, %c0_6] : memref<2x1x8x4xf32, #tpu.memory_space<vmem>>, vector<2x1x8x4xf32>
    tpu.vector_store %arg3[%c0_3, %c0_4, %c0_5, %c0_6], %0 {strides = array<i32>} : memref<2x1x8x4xf32, #tpu.memory_space<vmem>>, vector<2x1x8x4xf32>,
    return
  }
  func.func @transform_0(%arg0: i32, %arg1: i32) -> (i32, i32, i32, i32) {
    %c2_i32 = arith.constant 2 : i32
    %0 = arith.muli %arg1, %c2_i32 : i32
    %c0_i32 = arith.constant 0 : i32
    %c0_i32_0 = arith.constant 0 : i32
    %c0_i32_1 = arith.constant 0 : i32
    return %arg0, %0, %c0_i32, %c0_i32_0 : i32, i32, i32, i32
  }
  func.func @transform_1(%arg0: i32, %arg1: i32) -> (i32, i32, i32, i32) {
    %c0_i32 = arith.constant 0 : i32
    %c0_i32_0 = arith.constant 0 : i32
    %c0_i32_1 = arith.constant 0 : i32
    return %arg0, %arg1, %c0_i32, %c0_i32_0 : i32, i32, i32, i32
  }
}

</mosaic_0001>

<llo_original>
// kernel: tpu_custom_call.1
$region0: #{tpu_custom_call.1}
  #allocation0 [shape = 'u32[]', space=smem, size = 0x4, offset = 0x4, fixed_abs, tag = 'smem constant byte address 0x4 - core index']
  #allocation1 [shape = 'u32[144,128]{1,0:T(1,128)}', space=vmem, size = 0x12000, scoped, tag = 'internal scratch']
  %s0 = inlined_call_operand.vmem [shape: f32[2,16,16,4], index: 0, kind: input, shape index: {}]
  %s1 = inlined_call_operand.vmem [shape: f32[2,8,8,4], index: 1, kind: output, shape index: {}]
  %s2 = sld [smem:[#allocation0]]
  $region109: #{tpu_custom_call.1} parent=0
    _
  %s4 = ssub.s32 1, %s2
  %s5 = scalar_select 0, %s4, %s2
  $region1: #{tpu_custom_call.1} parent=0
    #allocation2 [shape = 'u8[32768]{0}', space=vmem, size = 0x8000, scoped, tag = 'input window, operand 0']
    #allocation3 [shape = 'u8[16384]{0}', space=vmem, size = 0x4000, scoped, tag = 'output window, operand 0']
    loop: start=0, step=1, limit=10
    $region2: #{tpu_custom_call.1} parent=1 // loop_pre_header
      _
    $region3: #{tpu_custom_call.1} parent=1 // loop_header
      %s7 = sphi 0, %s11
      %p8 = scmp.ge.s32.totalorder %s7, 10
      %s14 = sphi 0, %s26
      %s15 = sphi 0, %s22
      %s16 = sphi 0, %s14
      %s17 = sphi 0, %s15
      %s18 = sphi 0, %s16
      %s19 = sphi 0, %s17
      %s33 = sphi 0, %s35
      %s36 = sphi 0, %s33
      %s37 = sphi 0, %s36
      %s53 = sphi 0, %s37
      %s61 = sphi 0, %s63
      %s64 = sphi 0, %s61
      %s65 = sphi 0, %s64
      %s81 = sphi 0, %s65
    $region4: #{tpu_custom_call.1} parent=1 // loop_header_branch
      %10 = sbr.rel (%p8) target = $region8
    $region5: #{tpu_custom_call.1} parent=1 // loop_body
      %s12 = ssub.s32 %s7, 1
      %s13 = ssub.s32 %s7, 2
      %s20 = sadd.s32 1, %s15
      %p21 = scmp.ge.s32.totalorder %s20, 8
      %s22 = scalar_select %p21, 0, %s20
      %s23 = sadd.s32 1, %s14
      %s24 = scalar_select %p21, %s23, %s14
      %p25 = scmp.ge.s32.totalorder %s24, 1
      %s26 = scalar_select %p25, 0, %s24
      %s27 = smul.u32 %s15, 2
      %s28 = smul.u32 %s22, 2
      %s29 = ssub.s32 %s14, %s26
      %s30 = ssub.s32 %s27, %s28
      %s31 = sor.u32 %s29, %s30
      %p32 = scmp.eq.s32.totalorder %s31, 0
      %s34 = sadd.s32 %s33, 1
      %s35 = scalar_select %p32, %s33, %s34
      %p38 = pneg %p32
      %p39 = scmp.eq.s32.totalorder %s7, 7
      %p40 = por %p38, %p39
      %p41 = scmp.ne.s32.totalorder %s33, %s36
      %p42 = scmp.eq.s32.totalorder %s7, 0
      %p43 = por %p41, %p42
      %p44 = scmp.ne.s32.totalorder %s33, %s36
      %p45 = scmp.eq.s32.totalorder %s12, 7
      %p46 = por %p44, %p45
      %p47 = scmp.ne.s32.totalorder %s36, %s37
      %p48 = scmp.eq.s32.totalorder %s12, 0
      %p49 = por %p47, %p48
      %p50 = scmp.ne.s32.totalorder %s36, %s37
      %p51 = scmp.eq.s32.totalorder %s13, 7
      %p52 = por %p50, %p51
      %p54 = scmp.ne.s32.totalorder %s37, %s53
      %p55 = scmp.eq.s32.totalorder %s13, 0
      %p56 = por %p54, %p55
      %s57 = ssub.s32 %s14, %s26
      %s58 = ssub.s32 %s15, %s22
      %s59 = sor.u32 %s57, %s58
      %p60 = scmp.eq.s32.totalorder %s59, 0
      %s62 = sadd.s32 %s61, 1
      %s63 = scalar_select %p60, %s61, %s62
      %p66 = pneg %p60
      %p67 = scmp.eq.s32.totalorder %s7, 7
      %p68 = por %p66, %p67
      %p69 = scmp.ne.s32.totalorder %s61, %s64
      %p70 = scmp.eq.s32.totalorder %s7, 0
      %p71 = por %p69, %p70
      %p72 = scmp.ne.s32.totalorder %s61, %s64
      %p73 = scmp.eq.s32.totalorder %s12, 7
      %p74 = por %p72, %p73
      %p75 = scmp.ne.s32.totalorder %s64, %s65
      %p76 = scmp.eq.s32.totalorder %s12, 0
      %p77 = por %p75, %p76
      %p78 = scmp.ne.s32.totalorder %s64, %s65
      %p79 = scmp.eq.s32.totalorder %s13, 7
      %p80 = por %p78, %p79
      %p82 = scmp.ne.s32.totalorder %s65, %s81
      %p83 = scmp.eq.s32.totalorder %s13, 0
      %p84 = por %p82, %p83
      %p85 = scmp.le.s32.totalorder 1, %s7
      %p86 = scmp.lt.s32.totalorder %s7, 9
      %p87 = pnand %p85, %p86
      %p88 = pneg %p87
      // Predicated region
      $region9: #{tpu_custom_call.1} parent=5 // pred_check
        _
      $region10: #{tpu_custom_call.1} parent=5 // pred_check_branch
        %90 = sbr.rel (%p87) target = $region12
      $region11: #{tpu_custom_call.1} parent=5 // pred_region
        %s91 = ssub.s32 %s7, 1
      $region12: #{tpu_custom_call.1} parent=5 // pred_fallthru
        _
      %p92 = scmp.lt.s32.totalorder %s7, 8
      // Predicated region
      $region13: #{tpu_custom_call.1} parent=5 // pred_check
        %p93 = pneg %p92
      $region14: #{tpu_custom_call.1} parent=5 // pred_check_branch
        %95 = sbr.rel (%p93) target = $region16
      $region15: #{tpu_custom_call.1} parent=5 // pred_region
        // Predicated region
        $region17: #{tpu_custom_call.1} parent=15 // pred_check
          %p96 = pneg %p43
        $region18: #{tpu_custom_call.1} parent=15 // pred_check_branch
          %98 = sbr.rel (%p96) target = $region20
        $region19: #{tpu_custom_call.1} parent=15 // pred_region
          %s99 = sand.u32 %s33, 1
          %s100 = sand.u32 %s33, 1
          %s101 = smul.addr %s100, 32
          %s102 = scalar_lea.vmem [#allocation2], %s101
          %s103 = smul.u32 %s15, 2
          %s104 = smul.u32 2, %s14
          %s105 = smul.addr %s103, 2
          %s106 = smul.addr %s104, 32
          %s107 = sadd.s32 %s105, %s106
          %s108 = smul.addr %s107, 8
          %s109 = scalar_lea.vmem %s0, %s108
          // Predicated region
          $region21: #{tpu_custom_call.1} parent=19 // pred_check
            _
          $region22: #{tpu_custom_call.1} parent=19 // pred_check_branch
            %111 = sbr.rel (0) target = $region24
          $region23: #{tpu_custom_call.1} parent=19 // pred_region
            // Predicated region
            $region25: #{tpu_custom_call.1} parent=23 // pred_check
              _
            $region26: #{tpu_custom_call.1} parent=23 // pred_check_branch
              %113 = sbr.rel (0) target = $region28
            $region27: #{tpu_custom_call.1} parent=23 // pred_region
              // Predicated region
              $region40: #{tpu_custom_call.1} parent=27 // pred_check
                _
              $region41: #{tpu_custom_call.1} parent=27 // pred_check_branch
                %134 = sbr.rel (0) target = $region43
              $region42: #{tpu_custom_call.1} parent=27 // pred_region
                loop: start=0, step=1, limit=1
                $region44: #{tpu_custom_call.1} parent=42 // loop_pre_header
                  _
                $region45: #{tpu_custom_call.1} parent=42 // loop_header
                  %s136 = sphi 0, %s140
                  %p137 = scmp.ge.s32.totalorder %s136, 1
                  %s141 = sphi %s109, %s109
                  %s142 = sphi %s102, %s102
                $region46: #{tpu_custom_call.1} parent=42 // loop_header_branch
                  %139 = sbr.rel (%p137) target = $region50
                $region47: #{tpu_custom_call.1} parent=42 // loop_body
                  %v143 = vld [vmem:[%s141] sm:$0xff]
                  %144 = vst [vmem:[%s142] sm:$0xff] %v143
                  %v145 = vld [vmem:[%s141 + $0x8] sm:$0xff]
                  %146 = vst [vmem:[%s142 + $0x8] sm:$0xff] %v145
                  %v147 = vld [vmem:[%s141 + $0x100] sm:$0xff]
                  %148 = vst [vmem:[%s142 + $0x10] sm:$0xff] %v147
                  %v149 = vld [vmem:[%s141 + $0x108] sm:$0xff]
                  %150 = vst [vmem:[%s142 + $0x18] sm:$0xff] %v149
                $region48: #{tpu_custom_call.1} parent=42 // loop_footer
                  %s140 = sadd.s32 1, %s136
                $region49: #{tpu_custom_call.1} parent=42 // loop_footer_branch
                  %135 = sbr.rel target = $region45
                $region50: #{tpu_custom_call.1} parent=42 // loop_exit
                  _
              $region43: #{tpu_custom_call.1} parent=27 // pred_fallthru
                _
              // Predicated region
              $region51: #{tpu_custom_call.1} parent=27 // pred_check
                _
              $region52: #{tpu_custom_call.1} parent=27 // pred_check_branch
                %152 = sbr.rel target = $region54
              $region53: #{tpu_custom_call.1} parent=27 // pred_region
                _
              $region54: #{tpu_custom_call.1} parent=27 // pred_fallthru
                _
            $region28: #{tpu_custom_call.1} parent=23 // pred_fallthru
              _
            // Predicated region
            $region29: #{tpu_custom_call.1} parent=23 // pred_check
              _
            $region30: #{tpu_custom_call.1} parent=23 // pred_check_branch
              %115 = sbr.rel target = $region32
            $region31: #{tpu_custom_call.1} parent=23 // pred_region
              loop: start=0, step=1, limit=1
              $region33: #{tpu_custom_call.1} parent=31 // loop_pre_header
                _
              $region34: #{tpu_custom_call.1} parent=31 // loop_header
                %s118 = sphi 0, %s122
                %p119 = scmp.ge.s32.totalorder %s118, 1
                %s123 = sphi %s109, %s109
                %s124 = sphi %s102, %s102
              $region35: #{tpu_custom_call.1} parent=31 // loop_header_branch
                %121 = sbr.rel (%p119) target = $region39
              $region36: #{tpu_custom_call.1} parent=31 // loop_body
                %v125 = vld [vmem:[%s123] sm:$0xff]
                %126 = vst [vmem:[%s124] sm:$0xff] %v125
                %v127 = vld [vmem:[%s123 + $0x8] sm:$0xff]
                %128 = vst [vmem:[%s124 + $0x8] sm:$0xff] %v127
                %v129 = vld [vmem:[%s123 + $0x100] sm:$0xff]
                %130 = vst [vmem:[%s124 + $0x10] sm:$0xff] %v129
                %v131 = vld [vmem:[%s123 + $0x108] sm:$0xff]
                %132 = vst [vmem:[%s124 + $0x18] sm:$0xff] %v131
              $region37: #{tpu_custom_call.1} parent=31 // loop_footer
                %s122 = sadd.s32 1, %s118
              $region38: #{tpu_custom_call.1} parent=31 // loop_footer_branch
                %117 = sbr.rel target = $region34
              $region39: #{tpu_custom_call.1} parent=31 // loop_exit
                _
            $region32: #{tpu_custom_call.1} parent=23 // pred_fallthru
              _
          $region24: #{tpu_custom_call.1} parent=19 // pred_fallthru
            _
          %153 = vnop
        $region20: #{tpu_custom_call.1} parent=15 // pred_fallthru
          _
      $region16: #{tpu_custom_call.1} parent=5 // pred_fallthru
        _
      %p154 = scmp.le.s32.totalorder 1, %s7
      %p155 = scmp.lt.s32.totalorder %s7, 9
      %p156 = pnand %p154, %p155
      %p157 = pneg %p156
      // Predicated region
      $region55: #{tpu_custom_call.1} parent=5 // pred_check
        _
      $region56: #{tpu_custom_call.1} parent=5 // pred_check_branch
        %159 = sbr.rel (%p156) target = $region58
      $region57: #{tpu_custom_call.1} parent=5 // pred_region
        %s160 = ssub.s32 %s7, 1
        %s161 = sand.u32 %s36, 1
        %s162 = sand.u32 %s36, 1
        %s163 = smul.addr %s162, 32
        %s164 = scalar_lea.vmem [#allocation2], %s163
        // Predicated region
        $region59: #{tpu_custom_call.1} parent=57 // pred_check
          %p165 = pneg %p49
        $region60: #{tpu_custom_call.1} parent=57 // pred_check_branch
          %167 = sbr.rel (%p165) target = $region62
        $region61: #{tpu_custom_call.1} parent=57 // pred_region
          _
        $region62: #{tpu_custom_call.1} parent=57 // pred_fallthru
          _
        %s168 = sand.u32 %s36, 1
        %s169 = sand.u32 %s36, 1
        %s170 = smul.addr %s169, 32
        %s171 = scalar_lea.vmem [#allocation2], %s170
        %p172 = pneg %p49
        %p173 = pneg %p46
        %p174 = pneg %p77
        %p175 = pneg %p74
        %s176 = sand.u32 %s64, 1
        %s177 = sand.u32 %s64, 1
        %s178 = smul.addr %s177, 16
        %s179 = scalar_lea.vmem [#allocation3], %s178
        %s180 = smul.u32 %s17, 2
        %s181 = smul.u32 2, %s16
        %s182 = smul.u32 2, %s16
        %v183 = vld [vmem:[%s164] ss:$2 sm:$0xff]
        %s184 = scalar_lea.vmem %s164, 16 [#allocation2]
        %v185 = vld [vmem:[%s184] ss:$2 sm:$0xff]
        %vm186 = vcmask 31744
        %187 = vst.msk [vmem:[%s179] sm:$0xff] %vm186, %v183
        %188 = vst.msk [vmem:[%s179 + $0x8] sm:$0xff] %vm186, %v185
        %s189 = sand.u32 %s64, 1
        %s190 = sand.u32 %s64, 1
        %s191 = smul.addr %s190, 16
        %s192 = scalar_lea.vmem [#allocation3], %s191
        // Predicated region
        $region63: #{tpu_custom_call.1} parent=57 // pred_check
          %p193 = pneg %p74
        $region64: #{tpu_custom_call.1} parent=57 // pred_check_branch
          %195 = sbr.rel (%p193) target = $region66
        $region65: #{tpu_custom_call.1} parent=57 // pred_region
          %s196 = smul.u32 2, %s16
          %s197 = smul.addr %s196, 8
          %s198 = sadd.s32 %s17, %s197
          %s199 = smul.addr %s198, 8
          %s200 = scalar_lea.vmem %s1, %s199
          // Predicated region
          $region67: #{tpu_custom_call.1} parent=65 // pred_check
            _
          $region68: #{tpu_custom_call.1} parent=65 // pred_check_branch
            %202 = sbr.rel (0) target = $region70
          $region69: #{tpu_custom_call.1} parent=65 // pred_region
            // Predicated region
            $region71: #{tpu_custom_call.1} parent=69 // pred_check
              _
            $region72: #{tpu_custom_call.1} parent=69 // pred_check_branch
              %204 = sbr.rel (0) target = $region74
            $region73: #{tpu_custom_call.1} parent=69 // pred_region
              // Predicated region
              $region86: #{tpu_custom_call.1} parent=73 // pred_check
                _
              $region87: #{tpu_custom_call.1} parent=73 // pred_check_branch
                %221 = sbr.rel (0) target = $region89
              $region88: #{tpu_custom_call.1} parent=73 // pred_region
                loop: start=0, step=1, limit=1
                $region90: #{tpu_custom_call.1} parent=88 // loop_pre_header
                  _
                $region91: #{tpu_custom_call.1} parent=88 // loop_header
                  %s223 = sphi 0, %s227
                  %p224 = scmp.ge.s32.totalorder %s223, 1
                  %s228 = sphi %s192, %s192
                  %s229 = sphi %s200, %s200
                $region92: #{tpu_custom_call.1} parent=88 // loop_header_branch
                  %226 = sbr.rel (%p224) target = $region96
                $region93: #{tpu_custom_call.1} parent=88 // loop_body
                  %v230 = vld [vmem:[%s228] sm:$0xff]
                  %231 = vst [vmem:[%s229] sm:$0xff] %v230
                  %v232 = vld [vmem:[%s228 + $0x8] sm:$0xff]
                  %233 = vst [vmem:[%s229 + $0x40] sm:$0xff] %v232
                $region94: #{tpu_custom_call.1} parent=88 // loop_footer
                  %s227 = sadd.s32 1, %s223
                $region95: #{tpu_custom_call.1} parent=88 // loop_footer_branch
                  %222 = sbr.rel target = $region91
                $region96: #{tpu_custom_call.1} parent=88 // loop_exit
                  _
              $region89: #{tpu_custom_call.1} parent=73 // pred_fallthru
                _
              // Predicated region
              $region97: #{tpu_custom_call.1} parent=73 // pred_check
                _
              $region98: #{tpu_custom_call.1} parent=73 // pred_check_branch
                %235 = sbr.rel target = $region100
              $region99: #{tpu_custom_call.1} parent=73 // pred_region
                _
              $region100: #{tpu_custom_call.1} parent=73 // pred_fallthru
                _
            $region74: #{tpu_custom_call.1} parent=69 // pred_fallthru
              _
            // Predicated region
            $region75: #{tpu_custom_call.1} parent=69 // pred_check
              _
            $region76: #{tpu_custom_call.1} parent=69 // pred_check_branch
              %206 = sbr.rel target = $region78
            $region77: #{tpu_custom_call.1} parent=69 // pred_region
              loop: start=0, step=1, limit=1
              $region79: #{tpu_custom_call.1} parent=77 // loop_pre_header
                _
              $region80: #{tpu_custom_call.1} parent=77 // loop_header
                %s209 = sphi 0, %s213
                %p210 = scmp.ge.s32.totalorder %s209, 1
                %s214 = sphi %s192, %s192
                %s215 = sphi %s200, %s200
              $region81: #{tpu_custom_call.1} parent=77 // loop_header_branch
                %212 = sbr.rel (%p210) target = $region85
              $region82: #{tpu_custom_call.1} parent=77 // loop_body
                %v216 = vld [vmem:[%s214] sm:$0xff]
                %217 = vst [vmem:[%s215] sm:$0xff] %v216
                %v218 = vld [vmem:[%s214 + $0x8] sm:$0xff]
                %219 = vst [vmem:[%s215 + $0x40] sm:$0xff] %v218
              $region83: #{tpu_custom_call.1} parent=77 // loop_footer
                %s213 = sadd.s32 1, %s209
              $region84: #{tpu_custom_call.1} parent=77 // loop_footer_branch
                %208 = sbr.rel target = $region80
              $region85: #{tpu_custom_call.1} parent=77 // loop_exit
                _
            $region78: #{tpu_custom_call.1} parent=69 // pred_fallthru
              _
          $region70: #{tpu_custom_call.1} parent=65 // pred_fallthru
            _
          %236 = vnop
        $region66: #{tpu_custom_call.1} parent=57 // pred_fallthru
          _
      $region58: #{tpu_custom_call.1} parent=5 // pred_fallthru
        _
      %p237 = scmp.le.s32.totalorder 2, %s7
      // Predicated region
      $region101: #{tpu_custom_call.1} parent=5 // pred_check
        %p238 = pneg %p237
      $region102: #{tpu_custom_call.1} parent=5 // pred_check_branch
        %240 = sbr.rel (%p238) target = $region104
      $region103: #{tpu_custom_call.1} parent=5 // pred_region
        %s241 = ssub.s32 %s7, 2
        // Predicated region
        $region105: #{tpu_custom_call.1} parent=103 // pred_check
          %p242 = pneg %p80
        $region106: #{tpu_custom_call.1} parent=103 // pred_check_branch
          %244 = sbr.rel (%p242) target = $region108
        $region107: #{tpu_custom_call.1} parent=103 // pred_region
          %s245 = sand.u32 %s65, 1
          %s246 = sand.u32 %s65, 1
          %s247 = smul.addr %s246, 16
          %s248 = scalar_lea.vmem [#allocation3], %s247
        $region108: #{tpu_custom_call.1} parent=103 // pred_fallthru
          _
      $region104: #{tpu_custom_call.1} parent=5 // pred_fallthru
        _
    $region6: #{tpu_custom_call.1} parent=1 // loop_footer
      %s11 = sadd.s32 1, %s7
    $region7: #{tpu_custom_call.1} parent=1 // loop_footer_branch
      %6 = sbr.rel target = $region3
    $region8: #{tpu_custom_call.1} parent=1 // loop_exit
      _

</llo_original>
